<compile_context>
chip_gen: v7x
topology: tpu7x:2x2x1
jax: 0.10.0
libtpu: 0.0.40
codegen_flags: <defaults>
</compile_context>

<pallas_src>
import math
import functools

import numpy as np
import jax
import jax.numpy as jnp
from jax import lax
from jax.experimental import pallas as pl
from jax.experimental.pallas import tpu as pltpu


_VMEM_LIMIT = 32 * 1024 * 1024  # raise v5e's 16 MiB scoped default; <= v6e/v7x defaults


def _row_tile(m, target=256):
    """Largest row tile <= target that divides m (m itself when small)."""
    if m <= target:
        return m
    for t in (target, 128, 64, 32, 16, 8):
        if m % t == 0:
            return t
    return m


def _dot_t(a, b):
    # a [M, D] @ b[N, D].T -> [M, N], f32 accumulation, no explicit transpose.
    return lax.dot_general(a, b, (((1,), (1,)), ((), ())),
                           preferred_element_type=jnp.float32)


# ----------------------------- Pallas kernels -------------------------------

def _qkv_kernel(x_ref, w_ref, b_ref, o_ref):
    # y = x @ W_qkv + b_qkv      x: [tm, H], W: [H, 3H], b: [1, 3H]
    acc = jnp.dot(x_ref[...], w_ref[...], preferred_element_type=jnp.float32)
    o_ref[...] = (acc + b_ref[...]).astype(o_ref.dtype)


def qkv_project(x, w, b, out_dtype):
    M, K = x.shape
    N = w.shape[1]
    tm = _row_tile(M)
    return pl.pallas_call(
        _qkv_kernel,
        out_shape=jax.ShapeDtypeStruct((M, N), out_dtype),
        grid=(M // tm,),
        in_specs=[
            pl.BlockSpec((tm, K), lambda i: (i, 0)),
            pl.BlockSpec((K, N), lambda i: (0, 0)),
            pl.BlockSpec((1, N), lambda i: (0, 0)),
        ],
        out_specs=pl.BlockSpec((tm, N), lambda i: (i, 0)),
        compiler_params=pltpu.CompilerParams(
            dimension_semantics=("parallel",),
            vmem_limit_bytes=_VMEM_LIMIT,
        ),
    )(x, w, b)


def _mha_kernel(q_ref, k_ref, v_ref, rk_ref, rv_ref, o_ref, *,
                n_heads, max_rel, approx_recip):
    # One batch element per grid step; all heads processed here (lane-dense I/O).
    L = q_ref.shape[1]
    Hd = q_ref.shape[2]
    Dh = Hd // n_heads
    R = max_rel
    n_rel = 2 * R + 1

    q = q_ref[0]                     # [L, Hd]  (1/sqrt(Dh) already folded into W_q)
    k = k_ref[0]                     # [L, Hd]
    v = v_ref[0]                     # [L, Hd]
    rk = rk_ref[...]                 # [2R+1, Dh]
    rv = rv_ref[...].astype(jnp.float32)

    # Banded relative-distance masks built in-register (no [L, L, Dh] tensors).
    i_idx = lax.broadcasted_iota(jnp.int32, (L, L), 0)
    j_idx = lax.broadcasted_iota(jnp.int32, (L, L), 1)
    rel = jnp.clip(j_idx - i_idx, -R, R) + R                      # [L, L] in [0, 2R]
    masks = [(rel == r).astype(jnp.float32) for r in range(n_rel)]

    outs = []
    for h in range(n_heads):
        sl = slice(h * Dh, (h + 1) * Dh)
        qh, kh, vh = q[:, sl], k[:, sl], v[:, sl]

        # content scores + relative-position key scores (both on the MXU)
        scores = _dot_t(qh, kh)                                   # [L, L]  f32
        qr = _dot_t(qh, rk)                                       # [L, 2R+1] f32
        for r in range(n_rel):
            scores = scores + qr[:, r:r + 1] * masks[r]

        # softmax over keys (f32); reciprocal rides the EUP slot
        m = jnp.max(scores, axis=-1, keepdims=True)
        e = jnp.exp(scores - m)
        denom = jnp.sum(e, axis=-1, keepdims=True)
        p = e * pl.reciprocal(denom, approx=approx_recip)         # [L, L]  f32

        # weighted values: content + relative-position value term
        w1 = jnp.dot(p.astype(vh.dtype), vh,
                     preferred_element_type=jnp.float32)          # [L, Dh]
        w2 = jnp.zeros_like(w1)
        for r in range(n_rel):
            pr = jnp.sum(p * masks[r], axis=-1, keepdims=True)    # [L, 1]
            w2 = w2 + pr * rv[r:r + 1, :]
        outs.append(w1 + w2)

    ctx = outs[0] if n_heads == 1 else jnp.concatenate(outs, axis=-1)  # [L, Hd]
    o_ref[0] = ctx.astype(o_ref.dtype)                                 # lane-dense store


def mha_core(q, k, v, rel_k, rel_v, n_heads, max_rel, approx_recip, out_dtype):
    B, L, Hd = q.shape
    n_rel, Dh = rel_k.shape
    kern = functools.partial(_mha_kernel, n_heads=n_heads, max_rel=max_rel,
                             approx_recip=approx_recip)
    return pl.pallas_call(
        kern,
        out_shape=jax.ShapeDtypeStruct((B, L, Hd), out_dtype),
        grid=(B,),
        in_specs=[
            pl.BlockSpec((1, L, Hd), lambda b: (b, 0, 0)),
            pl.BlockSpec((1, L, Hd), lambda b: (b, 0, 0)),
            pl.BlockSpec((1, L, Hd), lambda b: (b, 0, 0)),
            pl.BlockSpec((n_rel, Dh), lambda b: (0, 0)),
            pl.BlockSpec((n_rel, Dh), lambda b: (0, 0)),
        ],
        out_specs=pl.BlockSpec((1, L, Hd), lambda b: (b, 0, 0)),
        compiler_params=pltpu.CompilerParams(
            dimension_semantics=("parallel",),
            vmem_limit_bytes=_VMEM_LIMIT,
        ),
    )(q, k, v, rel_k, rel_v)


def _out_kernel(ctx_ref, res_ref, w_ref, b_ref, g_ref, beta_ref, o_ref, *, eps):
    # (fc_o folded into dense): ctx @ W + b, + residual, LayerNorm(gamma, beta).
    h = jnp.dot(ctx_ref[...], w_ref[...], preferred_element_type=jnp.float32)
    h = h + b_ref[...] + res_ref[...]
    u = jnp.mean(h, axis=-1, keepdims=True)
    s = jnp.mean((h - u) ** 2, axis=-1, keepdims=True)
    hn = (h - u) * lax.rsqrt(s + eps)
    o_ref[...] = (g_ref[...] * hn + beta_ref[...]).astype(o_ref.dtype)


def output_block(ctx, residual, w, b, gamma, beta, eps=1e-12):
    M, Hd = residual.shape
    tm = _row_tile(M)
    kern = functools.partial(_out_kernel, eps=eps)
    return pl.pallas_call(
        kern,
        out_shape=jax.ShapeDtypeStruct((M, Hd), jnp.float32),
        grid=(M // tm,),
        in_specs=[
            pl.BlockSpec((tm, Hd), lambda i: (i, 0)),
            pl.BlockSpec((tm, Hd), lambda i: (i, 0)),
            pl.BlockSpec((Hd, Hd), lambda i: (0, 0)),
            pl.BlockSpec((1, Hd), lambda i: (0, 0)),
            pl.BlockSpec((1, Hd), lambda i: (0, 0)),
            pl.BlockSpec((1, Hd), lambda i: (0, 0)),
        ],
        out_specs=pl.BlockSpec((tm, Hd), lambda i: (i, 0)),
        compiler_params=pltpu.CompilerParams(
            dimension_semantics=("parallel",),
            vmem_limit_bytes=_VMEM_LIMIT,
        ),
    )(ctx, residual, w, b, gamma, beta)


# ----------------------------- Parameter folding ------------------------------

def fold_params(params, n_heads, compute_dtype):
    """Fold sa_* into fc_* (and fc_o into out_dense), concat QKV, fold 1/sqrt(Dh)."""
    hidden = params["sa_q_w"].shape[0]
    Dh = hidden // n_heads
    inv_scale = 1.0 / math.sqrt(Dh)
    hp = jax.lax.Precision.HIGHEST

    def fold(w1, b1, w2, b2):
        return (jnp.dot(w1, w2, precision=hp),
                jnp.dot(b1, w2, precision=hp) + b2)

    wq, bq = fold(params["sa_q_w"], params["sa_q_b"], params["fc_q_w"], params["fc_q_b"])
    wk, bk = fold(params["sa_k_w"], params["sa_k_b"], params["fc_k_w"], params["fc_k_b"])
    wv, bv = fold(params["sa_v_w"], params["sa_v_b"], params["fc_v_w"], params["fc_v_b"])
    # fold 1/sqrt(Dh) into the query projection (scales attn1 and attn2 identically)
    wq = wq * inv_scale
    bq = bq * inv_scale
    w_qkv = jnp.concatenate([wq, wk, wv], axis=1)        # [hidden, 3*hidden]
    b_qkv = jnp.concatenate([bq, bk, bv], axis=1)        # [1, 3*hidden]

    # fold MHA fc_o into the SelfOutput dense (two back-to-back linears)
    w_out = jnp.dot(params["fc_o_w"], params["out_dense_w"], precision=hp)
    b_out = jnp.dot(params["fc_o_b"], params["out_dense_w"], precision=hp) \
        + params["out_dense_b"]

    return {
        "w_qkv": w_qkv.astype(compute_dtype),
        "b_qkv": b_qkv,                                  # biases stay f32 (post-acc add)
        "w_out": w_out.astype(compute_dtype),
        "b_out": b_out,
        "rel_k": params["rel_k_table"].astype(compute_dtype),
        "rel_v": params["rel_v_table"],                  # consumed in f32 VPU math
        "gamma": params["ln_gamma"],
        "beta": params["ln_beta"],
    }


# ----------------------------- Forward (Pallas) ------------------------------

def attention_forward(params, x, attention_mask, n_heads, max_rel=2,
                      compute_dtype=jnp.float32):
    # attention_mask is intentionally unused: the reference SelfAttention never
    # forwards it into MultiHeadAttention (mask=None path).
    del attention_mask
    B, L, Hd = x.shape
    fp = fold_params(params, n_heads, compute_dtype)
    approx = jnp.dtype(compute_dtype) == jnp.dtype(jnp.bfloat16)

    xf = x.reshape(B * L, Hd)

    # fused (folded) QKV projection — single lane-dense [B*L, 3*hidden] matmul
    qkv = qkv_project(xf.astype(compute_dtype), fp["w_qkv"], fp["b_qkv"],
                      out_dtype=compute_dtype)
    qkv = qkv.reshape(B, L, 3 * Hd)
    q = qkv[..., :Hd]
    k = qkv[..., Hd:2 * Hd]
    v = qkv[..., 2 * Hd:]

    # multi-head attention with relative-position bias; [B, L, Hd] lane-dense output
    ctx = mha_core(q, k, v, fp["rel_k"], fp["rel_v"], n_heads, max_rel,
                   approx_recip=approx, out_dtype=compute_dtype)
    ctx = ctx.reshape(B * L, Hd)

    # fused (folded fc_o + dense) output projection + residual + LayerNorm
    out = output_block(ctx, xf, fp["w_out"], fp["b_out"], fp["gamma"], fp["beta"])
    return out.reshape(B, L, Hd)


# ----------------------------- Pure-JAX reference ----------------------------

def relative_position_embed(table, length_q, length_k, max_rel):
    rq = jnp.arange(length_q)
    rk = jnp.arange(length_k)
    dist = rk[None, :] - rq[:, None]
    idx = jnp.clip(dist, -max_rel, max_rel) + max_rel
    return table[idx]  # [Lq, Lk, head_dim]


def attention_reference(params, x, n_heads, max_rel=2):
    B, L, Hd = x.shape
    Dh = Hd // n_heads
    scale = math.sqrt(Dh)
    xf = x.reshape(B * L, Hd)

    def lin(z, name):
        return z @ params[name + "_w"] + params[name + "_b"]

    q = lin(lin(xf, "sa_q"), "fc_q")
    k = lin(lin(xf, "sa_k"), "fc_k")
    v = lin(lin(xf, "sa_v"), "fc_v")
    qh = q.reshape(B, L, n_heads, Dh).transpose(0, 2, 1, 3)
    kh = k.reshape(B, L, n_heads, Dh).transpose(0, 2, 1, 3)
    vh = v.reshape(B, L, n_heads, Dh).transpose(0, 2, 1, 3)

    rk2 = relative_position_embed(params["rel_k_table"], L, L, max_rel)
    rv2 = relative_position_embed(params["rel_v_table"], L, L, max_rel)

    attn1 = jnp.einsum("bhqd,bhkd->bhqk", qh, kh)
    attn2 = jnp.einsum("bhqd,qkd->bhqk", qh, rk2)
    attn = jax.nn.softmax((attn1 + attn2) / scale, axis=-1)
    w1 = jnp.einsum("bhqk,bhkd->bhqd", attn, vh)
    w2 = jnp.einsum("bhqk,qkd->bhqd", attn, rv2)
    ctx = (w1 + w2).transpose(0, 2, 1, 3).reshape(B * L, Hd)
    ctx = lin(ctx, "fc_o")

    h = lin(ctx, "out_dense") + xf
    u = jnp.mean(h, axis=-1, keepdims=True)
    s = jnp.mean((h - u) ** 2, axis=-1, keepdims=True)
    hn = (h - u) / jnp.sqrt(s + 1e-12)
    out = params["ln_gamma"] * hn + params["ln_beta"]
    return out.reshape(B, L, Hd)


# --------------------------------- Params -------------------------------------

def init_params(key, hidden, n_heads, max_rel):
    head_dim = hidden // n_heads
    names = [
        ("sa_q", hidden, hidden), ("sa_k", hidden, hidden), ("sa_v", hidden, hidden),
        ("fc_q", hidden, hidden), ("fc_k", hidden, hidden), ("fc_v", hidden, hidden),
        ("fc_o", hidden, hidden), ("out_dense", hidden, hidden),
    ]
    params = {}
    keys = jax.random.split(key, len(names) + 2)
    for (name, kin, kout), kk in zip(names, keys[: len(names)]):
        params[name + "_w"] = jax.random.normal(kk, (kin, kout), jnp.float32) * 0.05
        params[name + "_b"] = jnp.zeros((1, kout), jnp.float32)
    params["rel_k_table"] = (
        jax.random.normal(keys[-2], (2 * max_rel + 1, head_dim), jnp.float32) * 0.05
    )
    params["rel_v_table"] = (
        jax.random.normal(keys[-1], (2 * max_rel + 1, head_dim), jnp.float32) * 0.05
    )
    params["ln_gamma"] = jnp.ones((1, hidden), jnp.float32)
    params["ln_beta"] = jnp.zeros((1, hidden), jnp.float32)
    return params


# --------------------------------- main --------------------------------------

if __name__ == "__main__":
    B, L, HIDDEN, N_HEADS = 2, 8, 32, 4
    MAX_REL = 2

    key = jax.random.PRNGKey(0)
    kx, kp = jax.random.split(key)
    x = jax.random.normal(kx, (B, L, HIDDEN), jnp.float32)
    attention_mask = jnp.ones((B, 1, 1, L), jnp.float32)  # ignored, see forward
    params = init_params(kp, HIDDEN, N_HEADS, MAX_REL)

    ref = attention_reference(params, x, N_HEADS, MAX_REL)

    # f32 path: strict check against the faithful pure-JAX reference.
    out = attention_forward(params, x, attention_mask, N_HEADS, MAX_REL,
                            compute_dtype=jnp.float32)
    out = jax.block_until_ready(out)
    np.testing.assert_allclose(np.asarray(out), np.asarray(ref), rtol=1e-4, atol=1e-4)

    # bf16 matmul-operand path (MXU-friendly); softmax/LayerNorm stay f32.
    out_bf16 = attention_forward(params, x, attention_mask, N_HEADS, MAX_REL,
                                 compute_dtype=jnp.bfloat16)
    out_bf16 = jax.block_until_ready(out_bf16)
    np.testing.assert_allclose(np.asarray(out_bf16), np.asarray(ref),
                               rtol=1e-1, atol=1e-1)

    print("KERNEL_OK")
</pallas_src>

<mosaic_0001>
module attributes {stable_mosaic.version = 11 : i64} {
  func.func @_qkv_kernel(%arg0: i32, %arg1: memref<16x32xf32, #tpu.memory_space<vmem>>, %arg2: memref<32x96xf32, #tpu.memory_space<vmem>>, %arg3: memref<1x96xf32, #tpu.memory_space<vmem>>, %arg4: memref<16x96xf32, #tpu.memory_space<vmem>>) attributes {dimension_semantics = [#tpu.dimension_semantics<parallel>], iteration_bounds = array<i64: 1>, scalar_prefetch = 0 : i64, scratch_operands = 0 : i64, tpu.core_type = #tpu.core_type<tc>, window_params = [{transform_indices = @transform_0, window_bounds = array<i64: 16, 32>}, {pipeline_mode = #tpu.pipeline_mode<synchronous>, transform_indices = @transform_1, window_bounds = array<i64: 32, 96>}, {pipeline_mode = #tpu.pipeline_mode<synchronous>, transform_indices = @transform_2, window_bounds = array<i64: 1, 96>}, {transform_indices = @transform_3, window_bounds = array<i64: 16, 96>}]} {
    %c0 = arith.constant 0 : index
    %c0_0 = arith.constant 0 : index
    %0 = vector.load %arg1[%c0, %c0_0] : memref<16x32xf32, #tpu.memory_space<vmem>>, vector<16x32xf32>
    %c0_1 = arith.constant 0 : index
    %c0_2 = arith.constant 0 : index
    %1 = vector.load %arg2[%c0_1, %c0_2] : memref<32x96xf32, #tpu.memory_space<vmem>>, vector<32x96xf32>
    %cst = arith.constant dense<0.000000e+00> : vector<16x96xf32>
    %2 = tpu.matmul %0, %1, %cst {dimension_numbers = #tpu.dot_dimension_numbers<[1], [0], [0], [1], [0, 0, 1, 1], [], []>} : vector<16x32xf32>, vector<32x96xf32>, vector<16x96xf32> -> vector<16x96xf32>
    %c0_3 = arith.constant 0 : index
    %c0_4 = arith.constant 0 : index
    %3 = vector.load %arg3[%c0_3, %c0_4] : memref<1x96xf32, #tpu.memory_space<vmem>>, vector<1x96xf32>
    %4 = vector.broadcast %3 : vector<1x96xf32> to vector<16x96xf32>
    %5 = arith.addf %2, %4 : vector<16x96xf32>
    %c0_5 = arith.constant 0 : index
    %c0_6 = arith.constant 0 : index
    %6 = vector.load %arg4[%c0_5, %c0_6] : memref<16x96xf32, #tpu.memory_space<vmem>>, vector<16x96xf32>
    tpu.vector_store %arg4[%c0_5, %c0_6], %5 {strides = array<i32>} : memref<16x96xf32, #tpu.memory_space<vmem>>, vector<16x96xf32>,
    return
  }
  func.func @transform_0(%arg0: i32) -> (i32, i32) {
    %c0_i32 = arith.constant 0 : i32
    %c0_i32_0 = arith.constant 0 : i32
    return %arg0, %c0_i32 : i32, i32
  }
  func.func @transform_1(%arg0: i32) -> (i32, i32) {
    %c0_i32 = arith.constant 0 : i32
    %c0_i32_0 = arith.constant 0 : i32
    %c0_i32_1 = arith.constant 0 : i32
    return %c0_i32, %c0_i32_0 : i32, i32
  }
  func.func @transform_2(%arg0: i32) -> (i32, i32) {
    %c0_i32 = arith.constant 0 : i32
    %c0_i32_0 = arith.constant 0 : i32
    %c0_i32_1 = arith.constant 0 : i32
    return %c0_i32, %c0_i32_0 : i32, i32
  }
  func.func @transform_3(%arg0: i32) -> (i32, i32) {
    %c0_i32 = arith.constant 0 : i32
    %c0_i32_0 = arith.constant 0 : i32
    return %arg0, %c0_i32 : i32, i32
  }
}

</mosaic_0001>

<llo_original>
// kernel: tpu_custom_call.1
$region0: #{tpu_custom_call.1}
  #allocation0 [shape = 'u32[]', space=smem, size = 0x4, offset = 0x4, fixed_abs, tag = 'smem constant byte address 0x4 - core index']
  #allocation1 [shape = 'u32[144,128]{1,0:T(1,128)}', space=vmem, size = 0x12000, scoped, tag = 'internal scratch']
  %s0 = inlined_call_operand.hbm [shape: f32[16,32], index: 0, kind: input, shape index: {}]
  %s1 = inlined_call_operand.hbm [shape: f32[32,96], index: 1, kind: input, shape index: {}]
  %s2 = inlined_call_operand.vmem [shape: f32[1,96], index: 2, kind: input, shape index: {}]
  %s3 = inlined_call_operand.hbm [shape: f32[16,96], index: 3, kind: output, shape index: {}]
  %s4 = sld [smem:[#allocation0]]
  $region30: #{tpu_custom_call.1} parent=0
    _
  %s6 = ssub.s32 1, %s4
  %s7 = scalar_select 0, %s6, %s4
  $region1: #{tpu_custom_call.1} parent=0
    #allocation2 [shape = 'u8[8192]{0}', space=vmem, size = 0x2000, scoped, tag = 'input window, operand 0, single buffered']
    #allocation3 [shape = 's32[1]{0}', space=sflag, size = 0x4, scoped, tag = 'scoped memory for tpu_custom_call.1']
    #allocation4 [shape = 's32[1]{0}', space=sflag, size = 0x4, scoped, tag = 'scoped memory for tpu_custom_call.1']
    #allocation5 [shape = 'u8[16384]{0}', space=vmem, size = 0x4000, scoped, tag = 'input window, operand 1, single buffered']
    #allocation6 [shape = 's32[1]{0}', space=sflag, size = 0x4, scoped, tag = 'scoped memory for tpu_custom_call.1']
    #allocation7 [shape = 'u8[8192]{0}', space=vmem, size = 0x2000, scoped, tag = 'output window, operand 0, single buffered']
    %8 = vsyncpa [#allocation3], 0
    %9 = vsyncpa [#allocation6], 0
    %10 = vsyncpa [#allocation4], 0
    // Predicated region
    $region2: #{tpu_custom_call.1} parent=1 // pred_check
      _
    $region3: #{tpu_custom_call.1} parent=1 // pred_check_branch
      %12 = sbr.rel (0) target = $region5
    $region4: #{tpu_custom_call.1} parent=1 // pred_region
      %s14 = ssub.s32 256, 256
      %15 = vsyncadd [#allocation3], %s14
      %s16 = sshll.u32 [#allocation2], 4
      %s17 = int_to_ptr.vmem [resolvable:$true] %s16
      %22 = dma.hbm_to_vmem [thread:$0]  %s0, 256, %s17, [#allocation3], 128, 128, 8
    $region5: #{tpu_custom_call.1} parent=1 // pred_fallthru
      _
    // Predicated region
    $region6: #{tpu_custom_call.1} parent=1 // pred_check
      _
    $region7: #{tpu_custom_call.1} parent=1 // pred_check_branch
      %24 = sbr.rel (0) target = $region9
    $region8: #{tpu_custom_call.1} parent=1 // pred_region
      %s26 = ssub.s32 512, 512
      %27 = vsyncadd [#allocation6], %s26
      %s28 = sshll.u32 [#allocation5], 4
      %s29 = int_to_ptr.vmem [resolvable:$true] %s28
      %34 = dma.hbm_to_vmem [thread:$0]  %s1, 512, %s29, [#allocation6], 128, 128, 8
    $region9: #{tpu_custom_call.1} parent=1 // pred_fallthru
      _
    // Predicated region
    $region10: #{tpu_custom_call.1} parent=1 // pred_check
      _
    $region11: #{tpu_custom_call.1} parent=1 // pred_check_branch
      %36 = sbr.rel (0) target = $region13
    $region12: #{tpu_custom_call.1} parent=1 // pred_region
      _
    $region13: #{tpu_custom_call.1} parent=1 // pred_fallthru
      _
    // Predicated region
    $region14: #{tpu_custom_call.1} parent=1 // pred_check
      _
    $region15: #{tpu_custom_call.1} parent=1 // pred_check_branch
      %38 = sbr.rel (0) target = $region17
    $region16: #{tpu_custom_call.1} parent=1 // pred_region
      %39 = dma.done [#allocation3], 256
    $region17: #{tpu_custom_call.1} parent=1 // pred_fallthru
      _
    // Predicated region
    $region18: #{tpu_custom_call.1} parent=1 // pred_check
      _
    $region19: #{tpu_custom_call.1} parent=1 // pred_check_branch
      %41 = sbr.rel (0) target = $region21
    $region20: #{tpu_custom_call.1} parent=1 // pred_region
      %42 = dma.done [#allocation6], 512
    $region21: #{tpu_custom_call.1} parent=1 // pred_fallthru
      _
    %v43 = vld [vmem:[#allocation2] sm:$0xff]
    %v44 = vld [vmem:[#allocation2 + $0x8] sm:$0xff]
    %v45 = vld [vmem:[#allocation5] sm:$0xff]
    %v46 = vld [vmem:[#allocation5 + $0x8] sm:$0xff]
    %v47 = vld [vmem:[#allocation5 + $0x10] sm:$0xff]
    %v48 = vld [vmem:[#allocation5 + $0x18] sm:$0xff]
    %v49 = vld [vmem:[%s2] sm:$0x1]
    %v51 = vlaneseq
    %v52 = vshrl.u32 %v51, 7
    %v53 = vsub.s32 0, %v52
    %v54 = vrot.slane %v49, %v53
    %vm56 = vcmask 261120
    %v58 = vsel %vm56, %v43, 0
    %v61 = vsel %vm56, %v44, 0
    %63 = vmatprep.subr.mxu0 0.0
    %64 = vmatpush1.msra.mxu0 %v45
    %65 = vmatprep.subr.mxu0 0.0
    %66 = vmatpush1.msra.mxu0 %v46
    %67 = vmatprep.subr.mxu0 0.0
    %68 = vmatpush1.msra.mxu0 %v47
    %69 = vmatprep.subr.mxu0 0.0
    %70 = vmatpush1.msra.mxu0 %v48
    %71 = vmatprep.subr.mxu0 0.0
    %72 = vmatpush1.msra.mxu0 0.0
    %73 = vmatprep.subr.mxu0 0.0
    %74 = vmatpush1.msra.mxu0 0.0
    %75 = vmatprep.subr.mxu0 0.0
    %76 = vmatpush1.msra.mxu0 0.0
    %77 = vmatprep.subr.mxu0 0.0
    %78 = vmatpush1.msra.mxu0 0.0
    %79 = vmatprep.subr.mxu0 0.0
    %80 = vmatpush1.msra.mxu0 0.0
    %81 = vmatprep.subr.mxu0 0.0
    %82 = vmatpush1.msra.mxu0 0.0
    %83 = vmatprep.subr.mxu0 0.0
    %84 = vmatpush1.msra.mxu0 0.0
    %85 = vmatprep.subr.mxu0 0.0
    %86 = vmatpush1.msra.mxu0 0.0
    %87 = vmatprep.subr.mxu0 0.0
    %88 = vmatpush1.msra.mxu0 0.0
    %89 = vmatprep.subr.mxu0 0.0
    %90 = vmatpush1.msra.mxu0 0.0
    %91 = vmatprep.subr.mxu0 0.0
    %92 = vmatpush1.msra.mxu0 0.0
    %93 = vmatprep.subr.mxu0 0.0
    %94 = vmatpush1.msra.mxu0 0.0
    %95 = vmatprep.subr.mxu0 0.0
    %96 = vmatpush1.msra.mxu0 0.0
    %97 = vmatprep.subr.mxu0 0.0
    %98 = vmatpush1.msra.mxu0 0.0
    %99 = vmatprep.subr.mxu0 0.0
    %100 = vmatpush1.msra.mxu0 0.0
    %101 = vmatprep.subr.mxu0 0.0
    %102 = vmatpush1.msra.mxu0 0.0
    %103 = vmatprep.subr.mxu0 0.0
    %104 = vmatpush1.msra.mxu0 0.0
    %105 = vmatprep.subr.mxu0 0.0
    %106 = vmatpush1.msra.mxu0 0.0
    %107 = vmatprep.subr.mxu0 0.0
    %108 = vmatpush1.msra.mxu0 0.0
    %109 = vmatprep.subr.mxu0 0.0
    %110 = vmatpush1.msra.mxu0 0.0
    %111 = vmatprep.subr.mxu0 0.0
    %112 = vmatpush1.msra.mxu0 0.0
    %113 = vmatprep.subr.mxu0 0.0
    %114 = vmatpush1.msra.mxu0 0.0
    %115 = vmatprep.subr.mxu0 0.0
    %116 = vmatpush1.msra.mxu0 0.0
    %117 = vmatprep.subr.mxu0 0.0
    %118 = vmatpush1.msra.mxu0 0.0
    %119 = vmatprep.subr.mxu0 0.0
    %120 = vmatpush1.msra.mxu0 0.0
    %121 = vmatprep.subr.mxu0 0.0
    %122 = vmatpush1.msra.mxu0 0.0
    %123 = vmatprep.subr.mxu0 0.0
    %124 = vmatpush1.msra.mxu0 0.0
    %125 = vmatprep.subr.mxu0 0.0
    %126 = vmatpush1.msra.mxu0 0.0
    %127 = vmatprep.mubr.f32.mxu0 0.0
    %128 = vmatmul.mubr.f32.gmra.mrb[0].mxu0 %v58
    %v129 = vpop.f32.mrb[0].mxu0
    %v130 = vadd.f32 %v54, %v129
    %v131 = vpop.f32.mrb[0].mxu0
    %132 = vmatprep.mubr.f32.mxu0 0.0
    %133 = vmatmul.mubr.f32.gmra.mrb[0].mxu0 %v61
    %v134 = vpop.f32.mrb[0].mxu0
    %v135 = vadd.f32 %v54, %v134
    %v136 = vpop.f32.mrb[0].mxu0
    %137 = vdwg.mxu0
    %vm138 = vcmask 785408
    %139 = vst.msk [vmem:[#allocation7] sm:$0xff] %vm138, %v130
    %140 = vst.msk [vmem:[#allocation7 + $0x8] sm:$0xff] %vm138, %v135
    // Predicated region
    $region22: #{tpu_custom_call.1} parent=1 // pred_check
      _
    $region23: #{tpu_custom_call.1} parent=1 // pred_check_branch
      %142 = sbr.rel (0) target = $region25
    $region24: #{tpu_custom_call.1} parent=1 // pred_region
      %s144 = ssub.s32 256, 256
      %145 = vsyncadd [#allocation4], %s144
      %s146 = sshll.u32 [#allocation7], 4
      %s147 = int_to_ptr.vmem [resolvable:$true] %s146
      %152 = dma.vmem_to_hbm [thread:$0]  %s147, 256, %s3, [#allocation4], 128, 128, 8
    $region25: #{tpu_custom_call.1} parent=1 // pred_fallthru
      _
    // Predicated region
    $region26: #{tpu_custom_call.1} parent=1 // pred_check
      _
    $region27: #{tpu_custom_call.1} parent=1 // pred_check_branch
      %154 = sbr.rel (0) target = $region29
    $region28: #{tpu_custom_call.1} parent=1 // pred_region
      %155 = dma.done [#allocation4], 256
    $region29: #{tpu_custom_call.1} parent=1 // pred_fallthru
      _
    %156 = vsyncpa [#allocation3], 1
    %157 = vsyncpa [#allocation6], 1
    %158 = vsyncpa [#allocation4], 1

</llo_original>
